<compile_context>
chip_gen: v7x
topology: tpu7x:2x2x1
jax: 0.10.0
libtpu: 0.0.40
codegen_flags: <defaults>
</compile_context>

<pallas_src>
import jax
import jax.numpy as jnp
from jax import lax
from jax.experimental import pallas as pl
from jax.experimental.pallas import tpu as pltpu

EPS = 1e-5  # nn.LayerNorm default


def make_encoder_layer_kernel(A, D):
    """A (attention dim) and D (model dim) are static Python ints baked into the kernel."""
    inv_sqrt = 1.0 / (A ** 0.5)

    def kernel(x_ref, w_ref, vecs_ref, out_ref):
        x = x_ref[...]                                   # (Bblk, S, D) f32
        Bblk, S, _ = x.shape

        # One fused bf16 weight slab (single DMA): [wq | wk | wv | wo | fc2w | fc1w] columns.
        W = w_ref[...]                                   # (D, 2A+4D) bf16
        wqkv = W[:, : 2 * A + D]
        wo   = W[:, 2 * A + D     : 2 * A + 2 * D]
        fc2w = W[:, 2 * A + 2 * D : 2 * A + 3 * D]
        fc1w = W[:, 2 * A + 3 * D :]

        vecs = vecs_ref[...]                             # (6, D) f32
        fc2b, fc1b = vecs[0], vecs[1]
        g1, b1, g2, b2 = vecs[2], vecs[3], vecs[4], vecs[5]

        def layernorm(h, g, b):                          # f32 throughout
            mu = jnp.mean(h, axis=-1, keepdims=True)
            var = jnp.mean((h - mu) ** 2, axis=-1, keepdims=True)
            return (h - mu) * lax.rsqrt(var + EPS) * g + b

        def mm(a_f32, w_bf16):                           # bf16 MXU operands, f32 accumulate
            return jnp.dot(a_f32.astype(jnp.bfloat16), w_bf16,
                           preferred_element_type=jnp.float32)

        # ---- single-head self-attention: one fused QKV matmul over B*S rows ------------
        xf = x.reshape(Bblk * S, D)                      # flatten batch -> 2D matmuls
        proj = mm(xf, wqkv)                              # (Bblk*S, 2A+D) f32
        q = proj[:, :A].reshape(Bblk, S, A)
        k = proj[:, A:2 * A].reshape(Bblk, S, A)
        v = proj[:, 2 * A:].reshape(Bblk, S, D)
        # TODO(synk): at A=16/D=32 these slices sit at sub-128 lane offsets; pad each QKV
        #             section to a 128-lane boundary if profiling shows the relayout binding.

        s = jnp.einsum('bqa,bka->bqk',
                       q.astype(jnp.bfloat16), k.astype(jnp.bfloat16),
                       preferred_element_type=jnp.float32) * inv_sqrt
        s = s - jnp.max(s, axis=-1, keepdims=True)       # stable softmax
        e = jnp.exp(s)
        p = e / jnp.sum(e, axis=-1, keepdims=True)       # exact divide (review: correctness)
        a = jnp.einsum('bqk,bkd->bqd',
                       p.astype(jnp.bfloat16), v.astype(jnp.bfloat16),
                       preferred_element_type=jnp.float32)           # (Bblk, S, D) f32
        attn = mm(a.reshape(Bblk * S, D), wo)                        # (Bblk*S, D)

        x1 = layernorm(xf + attn, g1, b1)

        # ---- FFN: fc1(elu(fc2(x1))) ------------------------------------------------------
        h = mm(x1, fc2w) + fc2b
        h = jnp.where(h > 0, h, jnp.exp(jnp.minimum(h, 0.0)) - 1.0)  # ELU(alpha=1), safe exp
        h = mm(h, fc1w) + fc1b

        x2 = layernorm(x1 + h, g2, b2)
        out_ref[...] = x2.reshape(Bblk, S, D)

    return kernel


def _use_two_core_grid(B, S, D):
    """grid=(2,) (one step per TensorCore) only on multi-TC chips (v7x), only when B is even
    and each half-batch step has enough work to amortize the ~0.35us per-step overhead."""
    if B % 2 != 0:
        return False
    if B * S * D < (1 << 16):          # tiny workloads: single step beats any grid split
        return False
    try:
        kind = jax.devices()[0].device_kind.lower()
    except Exception:
        return False
    return ("v7" in kind) or ("7x" in kind)


def encoder_layer(x, params, two_core=None):
    B, S, D = x.shape
    A = params["wq"].shape[-1]
    # Explicit shape contracts (review: no silent assumptions inside the kernel).
    assert params["wq"].shape == (D, A)
    assert params["wk"].shape == (D, A)
    assert params["wv"].shape == (D, D)
    assert params["wo"].shape == (D, D)
    assert params["fc1w"].shape == (D, D) and params["fc2w"].shape == (D, D)

    # One fused weight slab (bf16) -> one DMA; columns: wq | wk | wv | wo | fc2w | fc1w.
    wslab = jnp.concatenate(
        [params["wq"], params["wk"], params["wv"],
         params["wo"], params["fc2w"], params["fc1w"]], axis=1).astype(jnp.bfloat16)
    # All (D,) vectors packed into one (6, D) f32 input.
    vecs = jnp.stack([params["fc2b"], params["fc1b"],
                      params["g1"], params["b1"],
                      params["g2"], params["b2"]], axis=0).astype(jnp.float32)

    if two_core is None:
        two_core = _use_two_core_grid(B, S, D)

    if two_core:
        grid = (2,)
        Bblk = B // 2
        semantics = ("parallel",)      # one sequence-block per TensorCore
    else:
        grid = (1,)
        Bblk = B
        semantics = ("arbitrary",)     # whole batch resident, single grid step

    x_spec = pl.BlockSpec((Bblk, S, D), lambda i: (i, 0, 0))
    out_spec = pl.BlockSpec((Bblk, S, D), lambda i: (i, 0, 0))
    w_spec = pl.BlockSpec((D, 2 * A + 4 * D), lambda i: (0, 0))
    v_spec = pl.BlockSpec((6, D), lambda i: (0, 0))

    out = pl.pallas_call(
        make_encoder_layer_kernel(A, D),
        out_shape=jax.ShapeDtypeStruct((B, S, D), jnp.float32),
        grid_spec=pltpu.PrefetchScalarGridSpec(
            num_scalar_prefetch=0,
            grid=grid,
            in_specs=[x_spec, w_spec, v_spec],
            out_specs=out_spec,
        ),
        compiler_params=pltpu.CompilerParams(dimension_semantics=semantics),
    )(x, wslab, vecs)

    return out


def reference(x, p):
    """Pure-JAX f32 reference mirroring the PyTorch EncoderLayer forward pass."""
    def ln(h, g, b):
        mu = h.mean(-1, keepdims=True)
        var = ((h - mu) ** 2).mean(-1, keepdims=True)
        return (h - mu) / jnp.sqrt(var + EPS) * g + b

    q = x @ p["wq"]
    k = x @ p["wk"]
    v = x @ p["wv"]
    s = (q @ jnp.swapaxes(k, -1, -2)) / jnp.sqrt(jnp.float32(p["wq"].shape[-1]))
    a = (jax.nn.softmax(s, axis=-1) @ v) @ p["wo"]
    x1 = ln(x + a, p["g1"], p["b1"])
    h = x1 @ p["fc2w"] + p["fc2b"]
    h = jnp.where(h > 0, h, jnp.exp(jnp.minimum(h, 0.0)) - 1.0)
    h = h @ p["fc1w"] + p["fc1b"]
    return ln(x1 + h, p["g2"], p["b2"])


def init_params(key, dim_val, dim_attn):
    ks = jax.random.split(key, 8)
    s = 0.1
    D, A = dim_val, dim_attn
    return {
        # attention (Query/Key/Value/out-proj, all bias-free in the source module)
        "wq": s * jax.random.normal(ks[0], (D, A), jnp.float32),
        "wk": s * jax.random.normal(ks[1], (D, A), jnp.float32),
        "wv": s * jax.random.normal(ks[2], (D, D), jnp.float32),
        "wo": s * jax.random.normal(ks[3], (D, D), jnp.float32),
        # fc1 / fc2 (with bias)
        "fc1w": s * jax.random.normal(ks[4], (D, D), jnp.float32),
        "fc1b": s * jax.random.normal(ks[5], (D,), jnp.float32),
        "fc2w": s * jax.random.normal(ks[6], (D, D), jnp.float32),
        "fc2b": s * jax.random.normal(ks[7], (D,), jnp.float32),
        # layer norms (nn.LayerNorm init: gamma=1, beta=0)
        "g1": jnp.ones((D,), jnp.float32), "b1": jnp.zeros((D,), jnp.float32),
        "g2": jnp.ones((D,), jnp.float32), "b2": jnp.zeros((D,), jnp.float32),
    }


if __name__ == "__main__":
    B, S = 2, 8
    DIM_VAL, DIM_ATTN = 32, 16   # n_heads = 1 (module default)

    key = jax.random.PRNGKey(0)
    kx, kp = jax.random.split(key, 2)
    x = jax.random.normal(kx, (B, S, DIM_VAL), jnp.float32)
    params = init_params(kp, DIM_VAL, DIM_ATTN)

    out = encoder_layer(x, params)
    out = jax.block_until_ready(out)

    ref = reference(x, params)
    assert out.shape == (B, S, DIM_VAL)
    # bf16 MXU operands (f32 accumulation) across 5 matmuls + 2 LayerNorms -> ~1-2% element
    # error on unit-scale outputs; tolerance sized accordingly (reference is pure f32).
    assert jnp.allclose(out, ref, atol=5e-2, rtol=5e-2), "mismatch vs pure-JAX reference"
    print("KERNEL_OK")
</pallas_src>

<mosaic_0001>
module attributes {stable_mosaic.version = 11 : i64} {
  func.func @kernel(%arg0: i32, %arg1: memref<2x8x32xf32, #tpu.memory_space<vmem>>, %arg2: memref<32x160xbf16, #tpu.memory_space<vmem>>, %arg3: memref<6x32xf32, #tpu.memory_space<vmem>>, %arg4: memref<2x8x32xf32, #tpu.memory_space<vmem>>) attributes {dimension_semantics = [#tpu.dimension_semantics<arbitrary>], iteration_bounds = array<i64: 1>, scalar_prefetch = 0 : i64, scratch_operands = 0 : i64, tpu.core_type = #tpu.core_type<tc>, window_params = [{transform_indices = @transform_0, window_bounds = array<i64: 2, 8, 32>}, {pipeline_mode = #tpu.pipeline_mode<synchronous>, transform_indices = @transform_1, window_bounds = array<i64: 32, 160>}, {pipeline_mode = #tpu.pipeline_mode<synchronous>, transform_indices = @transform_2, window_bounds = array<i64: 6, 32>}, {transform_indices = @transform_3, window_bounds = array<i64: 2, 8, 32>}]} {
    %c0 = arith.constant 0 : index
    %c0_0 = arith.constant 0 : index
    %c0_1 = arith.constant 0 : index
    %0 = vector.load %arg1[%c0, %c0_0, %c0_1] : memref<2x8x32xf32, #tpu.memory_space<vmem>>, vector<2x8x32xf32>
    %c0_2 = arith.constant 0 : index
    %c0_3 = arith.constant 0 : index
    %1 = vector.load %arg2[%c0_2, %c0_3] : memref<32x160xbf16, #tpu.memory_space<vmem>>, vector<32x160xbf16>
    %2 = vector.extract_strided_slice %1 {offsets = [0, 0], sizes = [32, 64], strides = [1, 1]} : vector<32x160xbf16> to vector<32x64xbf16>
    %3 = vector.extract_strided_slice %1 {offsets = [0, 64], sizes = [32, 32], strides = [1, 1]} : vector<32x160xbf16> to vector<32x32xbf16>
    %4 = vector.extract_strided_slice %1 {offsets = [0, 96], sizes = [32, 32], strides = [1, 1]} : vector<32x160xbf16> to vector<32x32xbf16>
    %5 = vector.extract_strided_slice %1 {offsets = [0, 128], sizes = [32, 32], strides = [1, 1]} : vector<32x160xbf16> to vector<32x32xbf16>
    %c0_4 = arith.constant 0 : index
    %c0_5 = arith.constant 0 : index
    %6 = vector.load %arg3[%c0_4, %c0_5] : memref<6x32xf32, #tpu.memory_space<vmem>>, vector<6x32xf32>
    %7 = vector.extract_strided_slice %6 {offsets = [0, 0], sizes = [1, 32], strides = [1, 1]} : vector<6x32xf32> to vector<1x32xf32>
    %8 = vector.shape_cast %7 : vector<1x32xf32> to vector<32xf32>
    %9 = vector.extract_strided_slice %6 {offsets = [1, 0], sizes = [1, 32], strides = [1, 1]} : vector<6x32xf32> to vector<1x32xf32>
    %10 = vector.shape_cast %9 : vector<1x32xf32> to vector<32xf32>
    %11 = vector.extract_strided_slice %6 {offsets = [2, 0], sizes = [1, 32], strides = [1, 1]} : vector<6x32xf32> to vector<1x32xf32>
    %12 = vector.shape_cast %11 : vector<1x32xf32> to vector<32xf32>
    %13 = vector.extract_strided_slice %6 {offsets = [3, 0], sizes = [1, 32], strides = [1, 1]} : vector<6x32xf32> to vector<1x32xf32>
    %14 = vector.shape_cast %13 : vector<1x32xf32> to vector<32xf32>
    %15 = vector.extract_strided_slice %6 {offsets = [4, 0], sizes = [1, 32], strides = [1, 1]} : vector<6x32xf32> to vector<1x32xf32>
    %16 = vector.shape_cast %15 : vector<1x32xf32> to vector<32xf32>
    %17 = vector.extract_strided_slice %6 {offsets = [5, 0], sizes = [1, 32], strides = [1, 1]} : vector<6x32xf32> to vector<1x32xf32>
    %18 = vector.shape_cast %17 : vector<1x32xf32> to vector<32xf32>
    %19 = vector.shape_cast %0 : vector<2x8x32xf32> to vector<16x32xf32>
    %20 = arith.truncf %19 : vector<16x32xf32> to vector<16x32xbf16>
    %cst = arith.constant dense<0.000000e+00> : vector<16x64xf32>
    %21 = tpu.matmul %20, %2, %cst {dimension_numbers = #tpu.dot_dimension_numbers<[1], [0], [0], [1], [0, 0, 1, 1], [], []>} : vector<16x32xbf16>, vector<32x64xbf16>, vector<16x64xf32> -> vector<16x64xf32>
    %22 = vector.extract_strided_slice %21 {offsets = [0, 0], sizes = [16, 16], strides = [1, 1]} : vector<16x64xf32> to vector<16x16xf32>
    %23 = vector.shape_cast %22 : vector<16x16xf32> to vector<2x8x16xf32>
    %24 = vector.extract_strided_slice %21 {offsets = [0, 16], sizes = [16, 16], strides = [1, 1]} : vector<16x64xf32> to vector<16x16xf32>
    %25 = vector.shape_cast %24 : vector<16x16xf32> to vector<2x8x16xf32>
    %26 = vector.extract_strided_slice %21 {offsets = [0, 32], sizes = [16, 32], strides = [1, 1]} : vector<16x64xf32> to vector<16x32xf32>
    %27 = vector.shape_cast %26 : vector<16x32xf32> to vector<2x8x32xf32>
    %28 = arith.truncf %23 : vector<2x8x16xf32> to vector<2x8x16xbf16>
    %29 = arith.truncf %25 : vector<2x8x16xf32> to vector<2x8x16xbf16>
    "tpu.trace_start"() <{level = 10 : i32, message = "bqa,bka->bqk"}> : () -> ()
    %cst_6 = arith.constant dense<0.000000e+00> : vector<2x8x8xf32>
    %30 = tpu.matmul %28, %29, %cst_6 {dimension_numbers = #tpu.dot_dimension_numbers<[2], [2], [1], [1], [0, 0, 0, 1, 1, 1], [0], [0]>} : vector<2x8x16xbf16>, vector<2x8x16xbf16>, vector<2x8x8xf32> -> vector<2x8x8xf32>
    "tpu.trace_stop"() : () -> ()
    %cst_7 = arith.constant 2.500000e-01 : f32
    %31 = vector.broadcast %cst_7 : f32 to vector<2x8x8xf32>
    %32 = arith.mulf %30, %31 : vector<2x8x8xf32>
    %cst_8 = arith.constant dense<0xFF800000> : vector<2x8xf32>
    %33 = vector.multi_reduction <maximumf>, %32, %cst_8 [2] : vector<2x8x8xf32> to vector<2x8xf32>
    %34 = vector.shape_cast %33 : vector<2x8xf32> to vector<2x8x1xf32>
    %35 = vector.broadcast %34 : vector<2x8x1xf32> to vector<2x8x8xf32>
    %36 = arith.subf %32, %35 : vector<2x8x8xf32>
    %37 = math.exp %36 : vector<2x8x8xf32>
    %cst_9 = arith.constant dense<0.000000e+00> : vector<2x8xf32>
    %38 = vector.multi_reduction <add>, %37, %cst_9 [2] : vector<2x8x8xf32> to vector<2x8xf32>
    %39 = vector.shape_cast %38 : vector<2x8xf32> to vector<2x8x1xf32>
    %40 = vector.broadcast %39 : vector<2x8x1xf32> to vector<2x8x8xf32>
    %41 = arith.divf %37, %40 : vector<2x8x8xf32>
    %42 = arith.truncf %41 : vector<2x8x8xf32> to vector<2x8x8xbf16>
    %43 = arith.truncf %27 : vector<2x8x32xf32> to vector<2x8x32xbf16>
    "tpu.trace_start"() <{level = 10 : i32, message = "bqk,bkd->bqd"}> : () -> ()
    %cst_10 = arith.constant dense<0.000000e+00> : vector<2x8x32xf32>
    %44 = tpu.matmul %42, %43, %cst_10 {dimension_numbers = #tpu.dot_dimension_numbers<[2], [1], [1], [2], [0, 0, 0, 1, 1, 2], [0], [0]>} : vector<2x8x8xbf16>, vector<2x8x32xbf16>, vector<2x8x32xf32> -> vector<2x8x32xf32>
    "tpu.trace_stop"() : () -> ()
    %45 = vector.shape_cast %44 : vector<2x8x32xf32> to vector<16x32xf32>
    %46 = arith.truncf %45 : vector<16x32xf32> to vector<16x32xbf16>
    %cst_11 = arith.constant dense<0.000000e+00> : vector<16x32xf32>
    %47 = tpu.matmul %46, %3, %cst_11 {dimension_numbers = #tpu.dot_dimension_numbers<[1], [0], [0], [1], [0, 0, 1, 1], [], []>} : vector<16x32xbf16>, vector<32x32xbf16>, vector<16x32xf32> -> vector<16x32xf32>
    %48 = arith.addf %19, %47 : vector<16x32xf32>
    %cst_12 = arith.constant dense<0.000000e+00> : vector<16xf32>
    %49 = vector.multi_reduction <add>, %48, %cst_12 [1] : vector<16x32xf32> to vector<16xf32>
    %50 = vector.shape_cast %49 : vector<16xf32> to vector<16x1xf32>
    %cst_13 = arith.constant 3.200000e+01 : f32
    %51 = vector.broadcast %cst_13 : f32 to vector<16x1xf32>
    %52 = arith.divf %50, %51 : vector<16x1xf32>
    %53 = vector.broadcast %52 : vector<16x1xf32> to vector<16x32xf32>
    %54 = arith.subf %48, %53 : vector<16x32xf32>
    %55 = arith.mulf %54, %54 : vector<16x32xf32>
    %cst_14 = arith.constant dense<0.000000e+00> : vector<16xf32>
    %56 = vector.multi_reduction <add>, %55, %cst_14 [1] : vector<16x32xf32> to vector<16xf32>
    %57 = vector.shape_cast %56 : vector<16xf32> to vector<16x1xf32>
    %cst_15 = arith.constant 3.200000e+01 : f32
    %58 = vector.broadcast %cst_15 : f32 to vector<16x1xf32>
    %59 = arith.divf %57, %58 : vector<16x1xf32>
    %60 = vector.broadcast %52 : vector<16x1xf32> to vector<16x32xf32>
    %61 = arith.subf %48, %60 : vector<16x32xf32>
    %cst_16 = arith.constant 9.99999974E-6 : f32
    %62 = vector.broadcast %cst_16 : f32 to vector<16x1xf32>
    %63 = arith.addf %59, %62 : vector<16x1xf32>
    %64 = math.rsqrt %63 : vector<16x1xf32>
    %65 = vector.broadcast %64 : vector<16x1xf32> to vector<16x32xf32>
    %66 = arith.mulf %61, %65 : vector<16x32xf32>
    %67 = vector.shape_cast %12 : vector<32xf32> to vector<1x32xf32>
    %68 = vector.broadcast %67 : vector<1x32xf32> to vector<16x32xf32>
    %69 = arith.mulf %66, %68 : vector<16x32xf32>
    %70 = vector.shape_cast %14 : vector<32xf32> to vector<1x32xf32>
    %71 = vector.broadcast %70 : vector<1x32xf32> to vector<16x32xf32>
    %72 = arith.addf %69, %71 : vector<16x32xf32>
    %73 = arith.truncf %72 : vector<16x32xf32> to vector<16x32xbf16>
    %cst_17 = arith.constant dense<0.000000e+00> : vector<16x32xf32>
    %74 = tpu.matmul %73, %4, %cst_17 {dimension_numbers = #tpu.dot_dimension_numbers<[1], [0], [0], [1], [0, 0, 1, 1], [], []>} : vector<16x32xbf16>, vector<32x32xbf16>, vector<16x32xf32> -> vector<16x32xf32>
    %75 = vector.shape_cast %8 : vector<32xf32> to vector<1x32xf32>
    %76 = vector.broadcast %75 : vector<1x32xf32> to vector<16x32xf32>
    %77 = arith.addf %74, %76 : vector<16x32xf32>
    %cst_18 = arith.constant 0.000000e+00 : f32
    %78 = vector.broadcast %cst_18 : f32 to vector<16x32xf32>
    %79 = arith.cmpf ogt, %77, %78 : vector<16x32xf32>
    %cst_19 = arith.constant 0.000000e+00 : f32
    %80 = vector.broadcast %cst_19 : f32 to vector<16x32xf32>
    %81 = arith.minimumf %77, %80 : vector<16x32xf32>
    %82 = math.exp %81 : vector<16x32xf32>
    %cst_20 = arith.constant 1.000000e+00 : f32
    %83 = vector.broadcast %cst_20 : f32 to vector<16x32xf32>
    %84 = arith.subf %82, %83 : vector<16x32xf32>
    %85 = arith.select %79, %77, %84 : vector<16x32xi1>, vector<16x32xf32>
    %86 = arith.truncf %85 : vector<16x32xf32> to vector<16x32xbf16>
    %cst_21 = arith.constant dense<0.000000e+00> : vector<16x32xf32>
    %87 = tpu.matmul %86, %5, %cst_21 {dimension_numbers = #tpu.dot_dimension_numbers<[1], [0], [0], [1], [0, 0, 1, 1], [], []>} : vector<16x32xbf16>, vector<32x32xbf16>, vector<16x32xf32> -> vector<16x32xf32>
    %88 = vector.shape_cast %10 : vector<32xf32> to vector<1x32xf32>
    %89 = vector.broadcast %88 : vector<1x32xf32> to vector<16x32xf32>
    %90 = arith.addf %87, %89 : vector<16x32xf32>
    %91 = arith.addf %72, %90 : vector<16x32xf32>
    %cst_22 = arith.constant dense<0.000000e+00> : vector<16xf32>
    %92 = vector.multi_reduction <add>, %91, %cst_22 [1] : vector<16x32xf32> to vector<16xf32>
    %93 = vector.shape_cast %92 : vector<16xf32> to vector<16x1xf32>
    %cst_23 = arith.constant 3.200000e+01 : f32
    %94 = vector.broadcast %cst_23 : f32 to vector<16x1xf32>
    %95 = arith.divf %93, %94 : vector<16x1xf32>
    %96 = vector.broadcast %95 : vector<16x1xf32> to vector<16x32xf32>
    %97 = arith.subf %91, %96 : vector<16x32xf32>
    %98 = arith.mulf %97, %97 : vector<16x32xf32>
    %cst_24 = arith.constant dense<0.000000e+00> : vector<16xf32>
    %99 = vector.multi_reduction <add>, %98, %cst_24 [1] : vector<16x32xf32> to vector<16xf32>
    %100 = vector.shape_cast %99 : vector<16xf32> to vector<16x1xf32>
    %cst_25 = arith.constant 3.200000e+01 : f32
    %101 = vector.broadcast %cst_25 : f32 to vector<16x1xf32>
    %102 = arith.divf %100, %101 : vector<16x1xf32>
    %103 = vector.broadcast %95 : vector<16x1xf32> to vector<16x32xf32>
    %104 = arith.subf %91, %103 : vector<16x32xf32>
    %cst_26 = arith.constant 9.99999974E-6 : f32
    %105 = vector.broadcast %cst_26 : f32 to vector<16x1xf32>
    %106 = arith.addf %102, %105 : vector<16x1xf32>
    %107 = math.rsqrt %106 : vector<16x1xf32>
    %108 = vector.broadcast %107 : vector<16x1xf32> to vector<16x32xf32>
    %109 = arith.mulf %104, %108 : vector<16x32xf32>
    %110 = vector.shape_cast %16 : vector<32xf32> to vector<1x32xf32>
    %111 = vector.broadcast %110 : vector<1x32xf32> to vector<16x32xf32>
    %112 = arith.mulf %109, %111 : vector<16x32xf32>
    %113 = vector.shape_cast %18 : vector<32xf32> to vector<1x32xf32>
    %114 = vector.broadcast %113 : vector<1x32xf32> to vector<16x32xf32>
    %115 = arith.addf %112, %114 : vector<16x32xf32>
    %116 = vector.shape_cast %115 : vector<16x32xf32> to vector<2x8x32xf32>
    %c0_27 = arith.constant 0 : index
    %c0_28 = arith.constant 0 : index
    %c0_29 = arith.constant 0 : index
    %117 = vector.load %arg4[%c0_27, %c0_28, %c0_29] : memref<2x8x32xf32, #tpu.memory_space<vmem>>, vector<2x8x32xf32>
    tpu.vector_store %arg4[%c0_27, %c0_28, %c0_29], %116 {strides = array<i32>} : memref<2x8x32xf32, #tpu.memory_space<vmem>>, vector<2x8x32xf32>,
    return
  }
  func.func @transform_0(%arg0: i32) -> (i32, i32, i32) {
    %c0_i32 = arith.constant 0 : i32
    %c0_i32_0 = arith.constant 0 : i32
    %c0_i32_1 = arith.constant 0 : i32
    return %arg0, %c0_i32, %c0_i32_0 : i32, i32, i32
  }
  func.func @transform_1(%arg0: i32) -> (i32, i32) {
    %c0_i32 = arith.constant 0 : i32
    %c0_i32_0 = arith.constant 0 : i32
    %c0_i32_1 = arith.constant 0 : i32
    return %c0_i32, %c0_i32_0 : i32, i32
  }
  func.func @transform_2(%arg0: i32) -> (i32, i32) {
    %c0_i32 = arith.constant 0 : i32
    %c0_i32_0 = arith.constant 0 : i32
    %c0_i32_1 = arith.constant 0 : i32
    return %c0_i32, %c0_i32_0 : i32, i32
  }
  func.func @transform_3(%arg0: i32) -> (i32, i32, i32) {
    %c0_i32 = arith.constant 0 : i32
    %c0_i32_0 = arith.constant 0 : i32
    %c0_i32_1 = arith.constant 0 : i32
    return %arg0, %c0_i32, %c0_i32_0 : i32, i32, i32
  }
}

</mosaic_0001>

<llo_original>
// kernel: tpu_custom_call.1
$region0: #{tpu_custom_call.1}
  #allocation0 [shape = 'u32[]', space=smem, size = 0x4, offset = 0x4, fixed_abs, tag = 'smem constant byte address 0x4 - core index']
  #allocation1 [shape = 'u32[144,128]{1,0:T(1,128)}', space=vmem, size = 0x12000, scoped, tag = 'internal scratch']
  %s0 = inlined_call_operand.hbm [shape: f32[2,8,32], index: 0, kind: input, shape index: {}]
  %s1 = inlined_call_operand.hbm [shape: bf16[32,160], index: 1, kind: input, shape index: {}]
  %s2 = inlined_call_operand.hbm [shape: f32[6,32], index: 2, kind: input, shape index: {}]
  %s3 = inlined_call_operand.hbm [shape: f32[2,8,32], index: 3, kind: output, shape index: {}]
  %s4 = sld [smem:[#allocation0]]
  $region34: #{tpu_custom_call.1} parent=0
    _
  %s6 = ssub.s32 1, %s4
  %s7 = scalar_select 0, %s6, %s4
  $region1: #{tpu_custom_call.1} parent=0
    #allocation2 [shape = 'u8[8192]{0}', space=vmem, size = 0x2000, scoped, tag = 'input window, operand 0, single buffered']
    #allocation3 [shape = 's32[1]{0}', space=sflag, size = 0x4, scoped, tag = 'scoped memory for tpu_custom_call.1']
    #allocation4 [shape = 's32[1]{0}', space=sflag, size = 0x4, scoped, tag = 'scoped memory for tpu_custom_call.1']
    #allocation5 [shape = 'u8[16384]{0}', space=vmem, size = 0x4000, scoped, tag = 'input window, operand 1, single buffered']
    #allocation6 [shape = 's32[1]{0}', space=sflag, size = 0x4, scoped, tag = 'scoped memory for tpu_custom_call.1']
    #allocation7 [shape = 'u8[4096]{0}', space=vmem, size = 0x1000, scoped, tag = 'input window, operand 2, single buffered']
    #allocation8 [shape = 'u8[8192]{0}', space=vmem, size = 0x2000, scoped, tag = 'output window, operand 0, single buffered']
    %8 = vsyncpa [#allocation3], 0
    %9 = vsyncpa [#allocation6], 0
    %10 = vsyncpa [#allocation4], 0
    // Predicated region
    $region2: #{tpu_custom_call.1} parent=1 // pred_check
      _
    $region3: #{tpu_custom_call.1} parent=1 // pred_check_branch
      %12 = sbr.rel (0) target = $region5
    $region4: #{tpu_custom_call.1} parent=1 // pred_region
      %s14 = ssub.s32 256, 256
      %15 = vsyncadd [#allocation3], %s14
      %s16 = sshll.u32 [#allocation2], 4
      %s17 = int_to_ptr.vmem [resolvable:$true] %s16
      %22 = dma.hbm_to_vmem [thread:$0]  %s0, 256, %s17, [#allocation3], 128, 128, 8
    $region5: #{tpu_custom_call.1} parent=1 // pred_fallthru
      _
    // Predicated region
    $region6: #{tpu_custom_call.1} parent=1 // pred_check
      _
    $region7: #{tpu_custom_call.1} parent=1 // pred_check_branch
      %24 = sbr.rel (0) target = $region9
    $region8: #{tpu_custom_call.1} parent=1 // pred_region
      %s26 = ssub.s32 512, 512
      %27 = vsyncadd [#allocation6], %s26
      %s28 = sshll.u32 [#allocation5], 4
      %s29 = int_to_ptr.vmem [resolvable:$true] %s28
      %34 = dma.hbm_to_vmem [thread:$0]  %s1, 512, %s29, [#allocation6], 128, 128, 8
    $region9: #{tpu_custom_call.1} parent=1 // pred_fallthru
      _
    // Predicated region
    $region10: #{tpu_custom_call.1} parent=1 // pred_check
      _
    $region11: #{tpu_custom_call.1} parent=1 // pred_check_branch
      %36 = sbr.rel (0) target = $region13
    $region12: #{tpu_custom_call.1} parent=1 // pred_region
      %s38 = ssub.s32 128, 128
      %39 = vsyncadd [#allocation6], %s38
      %s41 = sshll.u32 [#allocation7], 4
      %s42 = int_to_ptr.vmem [resolvable:$true] %s41
      %44 = dma.hbm_to_vmem [thread:$0]  %s2, 128, %s42, [#allocation6]
    $region13: #{tpu_custom_call.1} parent=1 // pred_fallthru
      _
    // Predicated region
    $region14: #{tpu_custom_call.1} parent=1 // pred_check
      _
    $region15: #{tpu_custom_call.1} parent=1 // pred_check_branch
      %46 = sbr.rel (0) target = $region17
    $region16: #{tpu_custom_call.1} parent=1 // pred_region
      %47 = dma.done [#allocation3], 256
    $region17: #{tpu_custom_call.1} parent=1 // pred_fallthru
      _
    // Predicated region
    $region18: #{tpu_custom_call.1} parent=1 // pred_check
      _
    $region19: #{tpu_custom_call.1} parent=1 // pred_check_branch
      %49 = sbr.rel (0) target = $region21
    $region20: #{tpu_custom_call.1} parent=1 // pred_region
      %50 = dma.done [#allocation6], 512
    $region21: #{tpu_custom_call.1} parent=1 // pred_fallthru
      _
    // Predicated region
    $region22: #{tpu_custom_call.1} parent=1 // pred_check
      _
    $region23: #{tpu_custom_call.1} parent=1 // pred_check_branch
      %52 = sbr.rel (0) target = $region25
    $region24: #{tpu_custom_call.1} parent=1 // pred_region
      %53 = dma.done [#allocation6], 128
    $region25: #{tpu_custom_call.1} parent=1 // pred_fallthru
      _
    %v55 = vld [vmem:[#allocation2] sm:$0xff]
    %v56 = vld [vmem:[#allocation2 + $0x8] sm:$0xff]
    %v57 = vld [vmem:[#allocation5] sm:$0xff]
    %v58 = vld [vmem:[#allocation5 + $0x8] sm:$0xff]
    %v59 = vld [vmem:[#allocation5 + $0x10] sm:$0xff]
    %v60 = vld [vmem:[#allocation5 + $0x18] sm:$0xff]
    %v61 = vld [vmem:[#allocation7] sm:$0x3f]
    %v62 = vpack.c.bf16 %v56, %v55
    %v67 = vunpack.c.l.b16 %v57
    %v68 = vunpack.c.l.b16 %v58
    %v69 = vunpack.c.l.b16 %v59
    %v70 = vunpack.c.l.b16 %v60
    %v71 = vpack.c.b16 %v68, %v67
    %v72 = vpack.c.b16 %v70, %v69
    %vm75 = vcmask 261120
    %v77 = vsel %vm75, %v62, 0
    %79 = vmatprep.subr.bf16.mxu0 0
    %80 = vmatpush1.bf16.msra.mxu0 %v71
    %81 = vmatprep.subr.bf16.mxu0 0
    %82 = vmatpush1.bf16.msra.mxu0 %v72
    %83 = vmatprep.subr.bf16.mxu0 0
    %84 = vmatpush1.bf16.msra.mxu0 0
    %85 = vmatprep.subr.bf16.mxu0 0
    %86 = vmatpush1.bf16.msra.mxu0 0
    %87 = vmatprep.subr.bf16.mxu0 0
    %88 = vmatpush1.bf16.msra.mxu0 0
    %89 = vmatprep.subr.bf16.mxu0 0
    %90 = vmatpush1.bf16.msra.mxu0 0
    %91 = vmatprep.subr.bf16.mxu0 0
    %92 = vmatpush1.bf16.msra.mxu0 0
    %93 = vmatprep.subr.bf16.mxu0 0
    %94 = vmatpush1.bf16.msra.mxu0 0
    %95 = vmatprep.subr.bf16.mxu0 0
    %96 = vmatpush1.bf16.msra.mxu0 0
    %97 = vmatprep.subr.bf16.mxu0 0
    %98 = vmatpush1.bf16.msra.mxu0 0
    %99 = vmatprep.subr.bf16.mxu0 0
    %100 = vmatpush1.bf16.msra.mxu0 0
    %101 = vmatprep.subr.bf16.mxu0 0
    %102 = vmatpush1.bf16.msra.mxu0 0
    %103 = vmatprep.subr.bf16.mxu0 0
    %104 = vmatpush1.bf16.msra.mxu0 0
    %105 = vmatprep.subr.bf16.mxu0 0
    %106 = vmatpush1.bf16.msra.mxu0 0
    %107 = vmatprep.subr.bf16.mxu0 0
    %108 = vmatpush1.bf16.msra.mxu0 0
    %109 = vmatprep.subr.bf16.mxu0 0
    %110 = vmatpush1.bf16.msra.mxu0 0
    %111 = vmatprep.mubr.bf16.mxu0 0
    %112 = vmatmul.mubr.bf16.gmra.mrb[0].mxu0 %v77
    %v113 = vpop.f32.mrb[0].mxu0
    %v114 = vadd.f32 0.0, %v113
    %v115 = vpop.f32.mrb[0].mxu0
    %v116 = vpop.f32.mrb[0].mxu0
    %v117 = vadd.f32 0.0, %v116
    %v118 = vpop.f32.mrb[0].mxu0
    %119 = vdwg.mxu0
    %v120 = vpack.c.bf16 %v114, %v114
    %v121 = vpack.c.bf16 %v117, %v117
    %123 = vrot.lane.b32.xlu0 %v120, 112
    %v124 = vpop.permute.xlu0 %123
    %vm125 = vcmask 130048
    %v127 = vsel %vm125, %v120, 0
    %v130 = vsel %vm125, %v124, 0
    %132 = vmatprep.subr.bf16.mxu0 0
    %133 = vmatpush1.bf16.xpose.msra.mxu0 %v130
    %134 = vmatprep.subr.bf16.mxu0 0
    %135 = vmatpush1.bf16.xpose.msra.mxu0 0
    %136 = vmatprep.subr.bf16.mxu0 0
    %137 = vmatpush1.bf16.xpose.msra.mxu0 0
    %138 = vmatprep.subr.bf16.mxu0 0
    %139 = vmatpush1.bf16.xpose.msra.mxu0 0
    %140 = vmatprep.subr.bf16.mxu0 0
    %141 = vmatpush1.bf16.xpose.msra.mxu0 0
    %142 = vmatprep.subr.bf16.mxu0 0
    %143 = vmatpush1.bf16.xpose.msra.mxu0 0
    %144 = vmatprep.subr.bf16.mxu0 0
    %145 = vmatpush1.bf16.xpose.msra.mxu0 0
    %146 = vmatprep.subr.bf16.mxu0 0
    %147 = vmatpush1.bf16.xpose.msra.mxu0 0
    %148 = vmatprep.subr.bf16.mxu0 0
    %149 = vmatpush1.bf16.xpose.msra.mxu0 0
    %150 = vmatprep.subr.bf16.mxu0 0
    %151 = vmatpush1.bf16.xpose.msra.mxu0 0
    %152 = vmatprep.subr.bf16.mxu0 0
    %153 = vmatpush1.bf16.xpose.msra.mxu0 0
    %154 = vmatprep.subr.bf16.mxu0 0
    %155 = vmatpush1.bf16.xpose.msra.mxu0 0
    %156 = vmatprep.subr.bf16.mxu0 0
    %157 = vmatpush1.bf16.xpose.msra.mxu0 0
    %158 = vmatprep.subr.bf16.mxu0 0
    %159 = vmatpush1.bf16.xpose.msra.mxu0 0
    %160 = vmatprep.subr.bf16.mxu0 0
    %161 = vmatpush1.bf16.xpose.msra.mxu0 0
    %162 = vmatprep.subr.bf16.mxu0 0
    %163 = vmatpush1.bf16.xpose.msra.mxu0 0
    %164 = vmatprep.mubr.bf16.mxu0 0
    %165 = vmatmul.mubr.bf16.gmra.mrb[0].mxu0 %v127
    %v166 = vpop.f32.mrb[0].mxu0
    %v167 = vadd.f32 0.0, %v166
    %v168 = vpop.f32.mrb[0].mxu0
    %v169 = vpop.f32.mrb[0].mxu0
    %v170 = vpop.f32.mrb[0].mxu0
    %171 = vdwg.mxu0
    %173 = vrot.lane.b32.xlu0 %v121, 112
    %v174 = vpop.permute.xlu0 %173
    %v176 = vsel %vm125, %v121, 0
    %v179 = vsel %vm125, %v174, 0
    %181 = vmatprep.subr.bf16.mxu0 0
    %182 = vmatpush1.bf16.xpose.msra.mxu0 %v179
    %183 = vmatprep.subr.bf16.mxu0 0
    %184 = vmatpush1.bf16.xpose.msra.mxu0 0
    %185 = vmatprep.subr.bf16.mxu0 0
    %186 = vmatpush1.bf16.xpose.msra.mxu0 0
    %187 = vmatprep.subr.bf16.mxu0 0
    %188 = vmatpush1.bf16.xpose.msra.mxu0 0
    %189 = vmatprep.subr.bf16.mxu0 0
    %190 = vmatpush1.bf16.xpose.msra.mxu0 0
    %191 = vmatprep.subr.bf16.mxu0 0
    %192 = vmatpush1.bf16.xpose.msra.mxu0 0
    %193 = vmatprep.subr.bf16.mxu0 0
    %194 = vmatpush1.bf16.xpose.msra.mxu0 0
    %195 = vmatprep.subr.bf16.mxu0 0
    %196 = vmatpush1.bf16.xpose.msra.mxu0 0
    %197 = vmatprep.subr.bf16.mxu0 0
    %198 = vmatpush1.bf16.xpose.msra.mxu0 0
    %199 = vmatprep.subr.bf16.mxu0 0
    %200 = vmatpush1.bf16.xpose.msra.mxu0 0
    %201 = vmatprep.subr.bf16.mxu0 0
    %202 = vmatpush1.bf16.xpose.msra.mxu0 0
    %203 = vmatprep.subr.bf16.mxu0 0
    %204 = vmatpush1.bf16.xpose.msra.mxu0 0
    %205 = vmatprep.subr.bf16.mxu0 0
    %206 = vmatpush1.bf16.xpose.msra.mxu0 0
    %207 = vmatprep.subr.bf16.mxu0 0
    %208 = vmatpush1.bf16.xpose.msra.mxu0 0
    %209 = vmatprep.subr.bf16.mxu0 0
    %210 = vmatpush1.bf16.xpose.msra.mxu0 0
    %211 = vmatprep.subr.bf16.mxu0 0
    %212 = vmatpush1.bf16.xpose.msra.mxu0 0
    %213 = vmatprep.mubr.bf16.mxu0 0
    %214 = vmatmul.mubr.bf16.gmra.mrb[0].mxu0 %v176
    %v215 = vpop.f32.mrb[0].mxu0
    %v216 = vadd.f32 0.0, %v215
    %v217 = vpop.f32.mrb[0].mxu0
    %v218 = vpop.f32.mrb[0].mxu0
    %v219 = vpop.f32.mrb[0].mxu0
    %220 = vdwg.mxu0
    %v221 = vmul.f32 %v167, 0.25
    %v222 = vmul.f32 %v216, 0.25
    %vm223 = vcmask 64512
    %v224 = vsel %vm223, %v221, -inf
    %225 = vmax.xlane.f32.xlu0 %v224
    %v226 = vpop.xlane.xlu0 %225
    %v227 = vsel %vm223, %v222, -inf
    %228 = vmax.xlane.f32.xlu0 %v227
    %v229 = vpop.xlane.xlu0 %228
    %v230 = vsub.f32 %v221, %v226
    %v231 = vsub.f32 %v222, %v229
    %v232 = vmul.f32 %v230, 1.442695
    %v233 = vpow.pop %v232
    %v234 = vmul.f32 %v231, 1.442695
    %v235 = vpow.pop %v234
    %v236 = vsel %vm223, %v233, 0.0
    %237 = vadd.xlane.f32.xlu0 %v236
    %v238 = vpop.xlane.xlu0 %237
    %v239 = vsel %vm223, %v235, 0.0
    %240 = vadd.xlane.f32.xlu0 %v239
    %v241 = vpop.xlane.xlu0 %240
    %v242 = vrcp.pop %v238
    %v243 = vmul.f32 %v233, %v242
    %v244 = vrcp.pop %v241
    %v245 = vmul.f32 %v235, %v244
    %v246 = vpack.c.bf16 %v243, %v243
    %v247 = vpack.c.bf16 %v245, %v245
    %248 = vrot.lane.b32.xlu0 %v120, 96
    %v249 = vpop.permute.xlu0 %248
    %v251 = vsel %vm223, %v246, 0
    %vm253 = vcmask 1043456
    %v255 = vsel %vm253, %v249, 0
    %257 = vmatprep.subr.bf16.mxu0 0
    %258 = vmatpush1.bf16.msra.mxu0 %v255
    %259 = vmatprep.subr.bf16.mxu0 0
    %260 = vmatpush1.bf16.msra.mxu0 0
    %261 = vmatprep.subr.bf16.mxu0 0
    %262 = vmatpush1.bf16.msra.mxu0 0
    %263 = vmatprep.subr.bf16.mxu0 0
    %264 = vmatpush1.bf16.msra.mxu0 0
    %265 = vmatprep.subr.bf16.mxu0 0
    %266 = vmatpush1.bf16.msra.mxu0 0
    %267 = vmatprep.subr.bf16.mxu0 0
    %268 = vmatpush1.bf16.msra.mxu0 0
    %269 = vmatprep.subr.bf16.mxu0 0
    %270 = vmatpush1.bf16.msra.mxu0 0
    %271 = vmatprep.subr.bf16.mxu0 0
    %272 = vmatpush1.bf16.msra.mxu0 0
    %273 = vmatprep.subr.bf16.mxu0 0
    %274 = vmatpush1.bf16.msra.mxu0 0
    %275 = vmatprep.subr.bf16.mxu0 0
    %276 = vmatpush1.bf16.msra.mxu0 0
    %277 = vmatprep.subr.bf16.mxu0 0
    %278 = vmatpush1.bf16.msra.mxu0 0
    %279 = vmatprep.subr.bf16.mxu0 0
    %280 = vmatpush1.bf16.msra.mxu0 0
    %281 = vmatprep.subr.bf16.mxu0 0
    %282 = vmatpush1.bf16.msra.mxu0 0
    %283 = vmatprep.subr.bf16.mxu0 0
    %284 = vmatpush1.bf16.msra.mxu0 0
    %285 = vmatprep.subr.bf16.mxu0 0
    %286 = vmatpush1.bf16.msra.mxu0 0
    %287 = vmatprep.subr.bf16.mxu0 0
    %288 = vmatpush1.bf16.msra.mxu0 0
    %289 = vmatprep.mubr.bf16.mxu0 0
    %290 = vmatmul.mubr.bf16.gmra.mrb[0].mxu0 %v251
    %v291 = vpop.f32.mrb[0].mxu0
    %v292 = vadd.f32 0.0, %v291
    %v293 = vpop.f32.mrb[0].mxu0
    %v294 = vpop.f32.mrb[0].mxu0
    %v295 = vpop.f32.mrb[0].mxu0
    %296 = vdwg.mxu0
    %297 = vrot.lane.b32.xlu0 %v121, 96
    %v298 = vpop.permute.xlu0 %297
    %v300 = vsel %vm223, %v247, 0
    %v303 = vsel %vm253, %v298, 0
    %305 = vmatprep.subr.bf16.mxu0 0
    %306 = vmatpush1.bf16.msra.mxu0 %v303
    %307 = vmatprep.subr.bf16.mxu0 0
    %308 = vmatpush1.bf16.msra.mxu0 0
    %309 = vmatprep.subr.bf16.mxu0 0
    %310 = vmatpush1.bf16.msra.mxu0 0
    %311 = vmatprep.subr.bf16.mxu0 0
    %312 = vmatpush1.bf16.msra.mxu0 0
    %313 = vmatprep.subr.bf16.mxu0 0
    %314 = vmatpush1.bf16.msra.mxu0 0
    %315 = vmatprep.subr.bf16.mxu0 0
    %316 = vmatpush1.bf16.msra.mxu0 0
    %317 = vmatprep.subr.bf16.mxu0 0
    %318 = vmatpush1.bf16.msra.mxu0 0
    %319 = vmatprep.subr.bf16.mxu0 0
    %320 = vmatpush1.bf16.msra.mxu0 0
    %321 = vmatprep.subr.bf16.mxu0 0
    %322 = vmatpush1.bf16.msra.mxu0 0
    %323 = vmatprep.subr.bf16.mxu0 0
    %324 = vmatpush1.bf16.msra.mxu0 0
    %325 = vmatprep.subr.bf16.mxu0 0
    %326 = vmatpush1.bf16.msra.mxu0 0
    %327 = vmatprep.subr.bf16.mxu0 0
    %328 = vmatpush1.bf16.msra.mxu0 0
    %329 = vmatprep.subr.bf16.mxu0 0
    %330 = vmatpush1.bf16.msra.mxu0 0
    %331 = vmatprep.subr.bf16.mxu0 0
    %332 = vmatpush1.bf16.msra.mxu0 0
    %333 = vmatprep.subr.bf16.mxu0 0
    %334 = vmatpush1.bf16.msra.mxu0 0
    %335 = vmatprep.subr.bf16.mxu0 0
    %336 = vmatpush1.bf16.msra.mxu0 0
    %337 = vmatprep.mubr.bf16.mxu0 0
    %338 = vmatmul.mubr.bf16.gmra.mrb[0].mxu0 %v300
    %v339 = vpop.f32.mrb[0].mxu0
    %v340 = vadd.f32 0.0, %v339
    %v341 = vpop.f32.mrb[0].mxu0
    %v342 = vpop.f32.mrb[0].mxu0
    %v343 = vpop.f32.mrb[0].mxu0
    %344 = vdwg.mxu0
    %v345 = vpack.c.bf16 %v340, %v292
    %346 = vrot.lane.b32.xlu0 %v71, 64
    %v347 = vpop.permute.xlu0 %346
    %348 = vrot.lane.b32.xlu0 %v72, 64
    %v349 = vpop.permute.xlu0 %348
    %v353 = vsel %vm75, %v345, 0
    %355 = vmatprep.subr.bf16.mxu0 0
    %356 = vmatpush1.bf16.msra.mxu0 %v347
    %357 = vmatprep.subr.bf16.mxu0 0
    %358 = vmatpush1.bf16.msra.mxu0 %v349
    %359 = vmatprep.subr.bf16.mxu0 0
    %360 = vmatpush1.bf16.msra.mxu0 0
    %361 = vmatprep.subr.bf16.mxu0 0
    %362 = vmatpush1.bf16.msra.mxu0 0
    %363 = vmatprep.subr.bf16.mxu0 0
    %364 = vmatpush1.bf16.msra.mxu0 0
    %365 = vmatprep.subr.bf16.mxu0 0
    %366 = vmatpush1.bf16.msra.mxu0 0
    %367 = vmatprep.subr.bf16.mxu0 0
    %368 = vmatpush1.bf16.msra.mxu0 0
    %369 = vmatprep.subr.bf16.mxu0 0
    %370 = vmatpush1.bf16.msra.mxu0 0
    %371 = vmatprep.subr.bf16.mxu0 0
    %372 = vmatpush1.bf16.msra.mxu0 0
    %373 = vmatprep.subr.bf16.mxu0 0
    %374 = vmatpush1.bf16.msra.mxu0 0
    %375 = vmatprep.subr.bf16.mxu0 0
    %376 = vmatpush1.bf16.msra.mxu0 0
    %377 = vmatprep.subr.bf16.mxu0 0
    %378 = vmatpush1.bf16.msra.mxu0 0
    %379 = vmatprep.subr.bf16.mxu0 0
    %380 = vmatpush1.bf16.msra.mxu0 0
    %381 = vmatprep.subr.bf16.mxu0 0
    %382 = vmatpush1.bf16.msra.mxu0 0
    %383 = vmatprep.subr.bf16.mxu0 0
    %384 = vmatpush1.bf16.msra.mxu0 0
    %385 = vmatprep.subr.bf16.mxu0 0
    %386 = vmatpush1.bf16.msra.mxu0 0
    %387 = vmatprep.mubr.bf16.mxu0 0
    %388 = vmatmul.mubr.bf16.gmra.mrb[0].mxu0 %v353
    %v389 = vpop.f32.mrb[0].mxu0
    %v390 = vadd.f32 0.0, %v389
    %v391 = vpop.f32.mrb[0].mxu0
    %v392 = vpop.f32.mrb[0].mxu0
    %v393 = vadd.f32 0.0, %v392
    %v394 = vpop.f32.mrb[0].mxu0
    %395 = vdwg.mxu0
    %v396 = vadd.f32 %v55, %v390
    %v397 = vadd.f32 %v56, %v393
    %v398 = vsel %vm75, %v396, 0.0
    %399 = vadd.xlane.f32.xlu0 %v398
    %v400 = vpop.xlane.xlu0 %399
    %v401 = vsel %vm75, %v397, 0.0
    %402 = vadd.xlane.f32.xlu0 %v401
    %v403 = vpop.xlane.xlu0 %402
    %v404 = vrcp.pop 32.0
    %v405 = vmul.f32 %v400, %v404
    %v406 = vmul.f32 %v403, %v404
    %v407 = vsub.f32 %v396, %v405
    %v408 = vsub.f32 %v397, %v406
    %v409 = vmul.f32 %v407, %v407
    %v410 = vmul.f32 %v408, %v408
    %v411 = vsel %vm75, %v409, 0.0
    %412 = vadd.xlane.f32.xlu0 %v411
    %v413 = vpop.xlane.xlu0 %412
    %v414 = vsel %vm75, %v410, 0.0
    %415 = vadd.xlane.f32.xlu0 %v414
    %v416 = vpop.xlane.xlu0 %415
    %v417 = vmul.f32 %v413, %v404
    %v418 = vmul.f32 %v416, %v404
    %v419 = vadd.f32 %v417, 1e-05
    %v420 = vadd.f32 %v418, 1e-05
    %v421 = vrsqrt.pop %v419
    %v422 = vrsqrt.pop %v420
    %v423 = vmul.f32 %v407, %v421
    %v424 = vmul.f32 %v408, %v422
    %v425 = vlaneseq
    %v426 = vshrl.u32 %v425, 7
    %v427 = vsub.s32 2, %v426
    %v428 = vrot.slane %v61, %v427
    %v429 = vmul.f32 %v423, %v428
    %v430 = vmul.f32 %v424, %v428
    %v431 = vlaneseq
    %v432 = vshrl.u32 %v431, 7
    %v433 = vsub.s32 3, %v432
    %v434 = vrot.slane %v61, %v433
    %v435 = vadd.f32 %v429, %v434
    %v436 = vadd.f32 %v430, %v434
    %v437 = vpack.c.bf16 %v436, %v435
    %v438 = vlaneseq
    %v439 = vshrl.u32 %v438, 7
    %v440 = vsub.s32 0, %v439
    %v441 = vrot.slane %v61, %v440
    %442 = vrot.lane.b32.xlu0 %v71, 32
    %v443 = vpop.permute.xlu0 %442
    %444 = vrot.lane.b32.xlu0 %v72, 32
    %v445 = vpop.permute.xlu0 %444
    %v449 = vsel %vm75, %v437, 0
    %451 = vmatprep.subr.bf16.mxu0 0
    %452 = vmatpush1.bf16.msra.mxu0 %v443
    %453 = vmatprep.subr.bf16.mxu0 0
    %454 = vmatpush1.bf16.msra.mxu0 %v445
    %455 = vmatprep.subr.bf16.mxu0 0
    %456 = vmatpush1.bf16.msra.mxu0 0
    %457 = vmatprep.subr.bf16.mxu0 0
    %458 = vmatpush1.bf16.msra.mxu0 0
    %459 = vmatprep.subr.bf16.mxu0 0
    %460 = vmatpush1.bf16.msra.mxu0 0
    %461 = vmatprep.subr.bf16.mxu0 0
    %462 = vmatpush1.bf16.msra.mxu0 0
    %463 = vmatprep.subr.bf16.mxu0 0
    %464 = vmatpush1.bf16.msra.mxu0 0
    %465 = vmatprep.subr.bf16.mxu0 0
    %466 = vmatpush1.bf16.msra.mxu0 0
    %467 = vmatprep.subr.bf16.mxu0 0
    %468 = vmatpush1.bf16.msra.mxu0 0
    %469 = vmatprep.subr.bf16.mxu0 0
    %470 = vmatpush1.bf16.msra.mxu0 0
    %471 = vmatprep.subr.bf16.mxu0 0
    %472 = vmatpush1.bf16.msra.mxu0 0
    %473 = vmatprep.subr.bf16.mxu0 0
    %474 = vmatpush1.bf16.msra.mxu0 0
    %475 = vmatprep.subr.bf16.mxu0 0
    %476 = vmatpush1.bf16.msra.mxu0 0
    %477 = vmatprep.subr.bf16.mxu0 0
    %478 = vmatpush1.bf16.msra.mxu0 0
    %479 = vmatprep.subr.bf16.mxu0 0
    %480 = vmatpush1.bf16.msra.mxu0 0
    %481 = vmatprep.subr.bf16.mxu0 0
    %482 = vmatpush1.bf16.msra.mxu0 0
    %483 = vmatprep.mubr.bf16.mxu0 0
    %484 = vmatmul.mubr.bf16.gmra.mrb[0].mxu0 %v449
    %v485 = vpop.f32.mrb[0].mxu0
    %v486 = vadd.f32 %v441, %v485
    %v487 = vpop.f32.mrb[0].mxu0
    %v488 = vpop.f32.mrb[0].mxu0
    %v489 = vadd.f32 %v441, %v488
    %v490 = vpop.f32.mrb[0].mxu0
    %491 = vdwg.mxu0
    %vm492 = vcmp.gt.f32.partialorder %v486, 0.0
    %vm493 = vcmp.gt.f32.partialorder %v489, 0.0
    %v494 = vmin.f32 %v486, 0.0
    %v495 = vmin.f32 %v489, 0.0
    %v496 = vmul.f32 %v494, 1.442695
    %v497 = vpow.pop %v496
    %v498 = vmul.f32 %v495, 1.442695
    %v499 = vpow.pop %v498
    %v500 = vsub.f32 %v497, 1.0
    %v501 = vsub.f32 %v499, 1.0
    %v502 = vsel %vm492, %v486, %v500
    %v503 = vsel %vm493, %v489, %v501
    %v504 = vpack.c.bf16 %v503, %v502
    %v505 = vlaneseq
    %v506 = vshrl.u32 %v505, 7
    %v507 = vsub.s32 1, %v506
    %v508 = vrot.slane %v61, %v507
    %v509 = vunpack.c.h.b16 %v57
    %v510 = vunpack.c.h.b16 %v58
    %v511 = vunpack.c.h.b16 %v59
    %v512 = vunpack.c.h.b16 %v60
    %v513 = vpack.c.b16 %v510, %v509
    %v514 = vpack.c.b16 %v512, %v511
    %v518 = vsel %vm75, %v504, 0
    %520 = vmatprep.subr.bf16.mxu0 0
    %521 = vmatpush1.bf16.msra.mxu0 %v513
    %522 = vmatprep.subr.bf16.mxu0 0
    %523 = vmatpush1.bf16.msra.mxu0 %v514
    %524 = vmatprep.subr.bf16.mxu0 0
    %525 = vmatpush1.bf16.msra.mxu0 0
    %526 = vmatprep.subr.bf16.mxu0 0
    %527 = vmatpush1.bf16.msra.mxu0 0
    %528 = vmatprep.subr.bf16.mxu0 0
    %529 = vmatpush1.bf16.msra.mxu0 0
    %530 = vmatprep.subr.bf16.mxu0 0
    %531 = vmatpush1.bf16.msra.mxu0 0
    %532 = vmatprep.subr.bf16.mxu0 0
    %533 = vmatpush1.bf16.msra.mxu0 0
    %534 = vmatprep.subr.bf16.mxu0 0
    %535 = vmatpush1.bf16.msra.mxu0 0
    %536 = vmatprep.subr.bf16.mxu0 0
    %537 = vmatpush1.bf16.msra.mxu0 0
    %538 = vmatprep.subr.bf16.mxu0 0
    %539 = vmatpush1.bf16.msra.mxu0 0
    %540 = vmatprep.subr.bf16.mxu0 0
    %541 = vmatpush1.bf16.msra.mxu0 0
    %542 = vmatprep.subr.bf16.mxu0 0
    %543 = vmatpush1.bf16.msra.mxu0 0
    %544 = vmatprep.subr.bf16.mxu0 0
    %545 = vmatpush1.bf16.msra.mxu0 0
    %546 = vmatprep.subr.bf16.mxu0 0
    %547 = vmatpush1.bf16.msra.mxu0 0
    %548 = vmatprep.subr.bf16.mxu0 0
    %549 = vmatpush1.bf16.msra.mxu0 0
    %550 = vmatprep.subr.bf16.mxu0 0
    %551 = vmatpush1.bf16.msra.mxu0 0
    %552 = vmatprep.mubr.bf16.mxu0 0
    %553 = vmatmul.mubr.bf16.gmra.mrb[0].mxu0 %v518
    %v554 = vpop.f32.mrb[0].mxu0
    %v555 = vadd.f32 %v508, %v554
    %v556 = vpop.f32.mrb[0].mxu0
    %v557 = vpop.f32.mrb[0].mxu0
    %v558 = vadd.f32 %v508, %v557
    %v559 = vpop.f32.mrb[0].mxu0
    %560 = vdwg.mxu0
    %v561 = vadd.f32 %v435, %v555
    %v562 = vadd.f32 %v436, %v558
    %v563 = vsel %vm75, %v561, 0.0
    %564 = vadd.xlane.f32.xlu0 %v563
    %v565 = vpop.xlane.xlu0 %564
    %v566 = vsel %vm75, %v562, 0.0
    %567 = vadd.xlane.f32.xlu0 %v566
    %v568 = vpop.xlane.xlu0 %567
    %v569 = vmul.f32 %v565, %v404
    %v570 = vmul.f32 %v568, %v404
    %v571 = vsub.f32 %v561, %v569
    %v572 = vsub.f32 %v562, %v570
    %v573 = vmul.f32 %v571, %v571
    %v574 = vmul.f32 %v572, %v572
    %v575 = vsel %vm75, %v573, 0.0
    %576 = vadd.xlane.f32.xlu0 %v575
    %v577 = vpop.xlane.xlu0 %576
    %v578 = vsel %vm75, %v574, 0.0
    %579 = vadd.xlane.f32.xlu0 %v578
    %v580 = vpop.xlane.xlu0 %579
    %v581 = vmul.f32 %v577, %v404
    %v582 = vmul.f32 %v580, %v404
    %v583 = vadd.f32 %v581, 1e-05
    %v584 = vadd.f32 %v582, 1e-05
    %v585 = vrsqrt.pop %v583
    %v586 = vrsqrt.pop %v584
    %v587 = vmul.f32 %v571, %v585
    %v588 = vmul.f32 %v572, %v586
    %v589 = vlaneseq
    %v590 = vshrl.u32 %v589, 7
    %v591 = vsub.s32 4, %v590
    %v592 = vrot.slane %v61, %v591
    %v593 = vmul.f32 %v587, %v592
    %v594 = vmul.f32 %v588, %v592
    %v595 = vlaneseq
    %v596 = vshrl.u32 %v595, 7
    %v597 = vsub.s32 5, %v596
    %v598 = vrot.slane %v61, %v597
    %v599 = vadd.f32 %v593, %v598
    %v600 = vadd.f32 %v594, %v598
    %601 = vst.msk [vmem:[#allocation8] sm:$0xff] %vm75, %v599
    %602 = vst.msk [vmem:[#allocation8 + $0x8] sm:$0xff] %vm75, %v600
    // Predicated region
    $region26: #{tpu_custom_call.1} parent=1 // pred_check
      _
    $region27: #{tpu_custom_call.1} parent=1 // pred_check_branch
      %604 = sbr.rel (0) target = $region29
    $region28: #{tpu_custom_call.1} parent=1 // pred_region
      %s606 = ssub.s32 256, 256
      %607 = vsyncadd [#allocation4], %s606
      %s608 = sshll.u32 [#allocation8], 4
      %s609 = int_to_ptr.vmem [resolvable:$true] %s608
      %614 = dma.vmem_to_hbm [thread:$0]  %s609, 256, %s3, [#allocation4], 128, 128, 8
    $region29: #{tpu_custom_call.1} parent=1 // pred_fallthru
      _
    // Predicated region
    $region30: #{tpu_custom_call.1} parent=1 // pred_check
      _
    $region31: #{tpu_custom_call.1} parent=1 // pred_check_branch
      %616 = sbr.rel (0) target = $region33
    $region32: #{tpu_custom_call.1} parent=1 // pred_region
      %617 = dma.done [#allocation4], 256
    $region33: #{tpu_custom_call.1} parent=1 // pred_fallthru
      _
    %618 = vsyncpa [#allocation3], 1
    %619 = vsyncpa [#allocation6], 1
    %620 = vsyncpa [#allocation4], 1

</llo_original>
